<compile_context>
chip_gen: v6e
topology: v6e:2x2x1
jax: 0.10.0
libtpu: 0.0.40
codegen_flags: <defaults>
</compile_context>

<pallas_src>
import functools
import math

import jax
import jax.numpy as jnp
from jax import lax
from jax.experimental import pallas as pl
from jax.experimental.pallas import tpu as pltpu


# ----------------------------------------------------------------------------
# Stage 1: full-width linear projection  y = x @ W_io + b   (bf16 in/out)
# ----------------------------------------------------------------------------
def _linear_kernel(x_ref, w_ref, b_ref, o_ref):
    """x: (tS, D) bf16, w: (D, D) bf16 (in, out layout), b: (1, D) f32 -> o bf16."""
    acc = jnp.dot(x_ref[...], w_ref[...],
                  preferred_element_type=jnp.float32)      # full-width MXU GEMM
    o_ref[...] = (acc + b_ref[...]).astype(o_ref.dtype)


def _linear_project_pallas(x_bf16, w_io_bf16, b_f32, *, row_tile=None):
    """(S, D) bf16 @ (D, D) bf16 + (D,) f32 -> (S, D) bf16, tiled over rows."""
    S, D = x_bf16.shape
    if row_tile is None:
        row_tile = S
        if S > 1024:  # bound per-step VMEM for long position tables
            for t in (1024, 512, 256, 128, 64, 32, 16, 8):
                if S % t == 0:
                    row_tile = t
                    break
    assert S % row_tile == 0
    n_s = S // row_tile

    cost = pl.CostEstimate(
        flops=int(2 * S * D * D),
        transcendentals=0,
        # x in + out (bf16), weight fetched once (grid-invariant block), bias f32
        bytes_accessed=int(S * D * 2 + S * D * 2 + D * D * 2 + D * 4),
    )

    return pl.pallas_call(
        _linear_kernel,
        out_shape=jax.ShapeDtypeStruct((S, D), jnp.bfloat16),
        grid_spec=pltpu.PrefetchScalarGridSpec(
            num_scalar_prefetch=0,
            grid=(n_s,),
            in_specs=[
                pl.BlockSpec((row_tile, D), lambda i: (i, 0)),
                pl.BlockSpec((D, D), lambda i: (0, 0)),     # resident weight
                pl.BlockSpec((1, D), lambda i: (0, 0)),
            ],
            out_specs=pl.BlockSpec((row_tile, D), lambda i: (i, 0)),
        ),
        compiler_params=pltpu.CompilerParams(
            dimension_semantics=("parallel",)),
        cost_estimate=cost,
    )(x_bf16, w_io_bf16, b_f32.reshape(1, D))


# ----------------------------------------------------------------------------
# Stage 2: per-head score matmul  scores[h] = Q_h @ K_h^T   (scale pre-folded)
# ----------------------------------------------------------------------------
def _scores_kernel(q_ref, k_ref, o_ref):
    """q: (1, TQ, d_k) bf16, k: (1, SK, d_k) bf16 -> o: (1, TQ, SK) f32."""
    o_ref[0] = lax.dot_general(
        q_ref[0], k_ref[0],
        dimension_numbers=(((1,), (1,)), ((), ())),         # contract d_k, no transpose
        preferred_element_type=jnp.float32)


def _pick_q_tile(sq, sk, d_k, budget_bytes=20 << 20):
    """Largest q tile whose double-buffered blocks fit comfortably in VMEM."""
    def step_bytes(t):
        return 2 * (t * d_k * 2 + sk * d_k * 2 + t * sk * 4) + t * sk * 4

    candidates = [sq] + [t for t in (2048, 1024, 512, 256, 128, 64, 32, 16, 8)
                         if t < sq and sq % t == 0]
    for t in candidates:
        if step_bytes(t) <= budget_bytes:
            return t
    return candidates[-1]


def _scores_pallas(qh_bf16, kh_bf16, *, q_tile=None):
    """qh: (h, Sq, d_k) bf16 (scale folded in), kh: (h, Sk, d_k) bf16 -> (h, Sq, Sk) f32."""
    h, Sq, d_k = qh_bf16.shape
    _, Sk, _ = kh_bf16.shape
    if q_tile is None:
        q_tile = _pick_q_tile(Sq, Sk, d_k)
    assert Sq % q_tile == 0
    n_q = Sq // q_tile

    # Per-step VMEM (double-buffered in/out + f32 temp), used to size the limit.
    step_bytes = 2 * (q_tile * d_k * 2 + Sk * d_k * 2 + q_tile * Sk * 4) + q_tile * Sk * 4
    vmem_limit = int(min(max(2 * step_bytes, 32 << 20), 56 << 20))

    cost = pl.CostEstimate(
        flops=int(2 * h * Sq * Sk * d_k),
        transcendentals=0,
        # Q blocks each fetched once; K fetched once per head (q axis innermost,
        # block index unchanged across it); f32 score writes.
        bytes_accessed=int(h * Sq * d_k * 2 + h * Sk * d_k * 2 + h * Sq * Sk * 4),
    )

    return pl.pallas_call(
        _scores_kernel,
        out_shape=jax.ShapeDtypeStruct((h, Sq, Sk), jnp.float32),
        grid_spec=pltpu.PrefetchScalarGridSpec(
            num_scalar_prefetch=0,
            grid=(h, n_q),                                   # q-tile axis innermost
            in_specs=[
                pl.BlockSpec((1, q_tile, d_k), lambda i, j: (i, j, 0)),
                pl.BlockSpec((1, Sk, d_k), lambda i, j: (i, 0, 0)),
            ],
            out_specs=pl.BlockSpec((1, q_tile, Sk), lambda i, j: (i, j, 0)),
        ),
        compiler_params=pltpu.CompilerParams(
            # Both axes independent -> megacore sharding on v7x.
            dimension_semantics=("parallel", "parallel"),
            vmem_limit_bytes=vmem_limit),
        cost_estimate=cost,
    )(qh_bf16, kh_bf16)


# ----------------------------------------------------------------------------
# Module forward (default path: mask=None, postionMat=None, bias=None)
# ----------------------------------------------------------------------------
def multi_headed_attention_rel(query, key, value, pos_encoding,
                               wq, bq, wk, bk, *, num_heads):
    """Default-path forward of MultiHeadedAttentionRel.

    query/key/value: (B, S, d_model) -- only their sizes are used on this path.
    pos_encoding: (1, max_len, d_model) learned positional table.
    wq/bq, wk/bk: parameters of self.linears[0] / self.linears[1]
                  (PyTorch (out, in) weight layout).
    Returns (B, h, Sq, Sk) position-attention scores (float32).
    """
    nbatches, q_len = query.shape[0], query.shape[1]
    k_len = key.shape[1]
    del value  # the value projection never affects the returned scores

    D = pos_encoding.shape[-1]
    h = num_heads
    assert D % h == 0, "d_model must be divisible by the number of heads"
    d_k = D // h
    scale = 1.0 / math.sqrt(2 * d_k)

    # bf16 pre-cast in the wrapper (half the DMA bytes / VMEM footprint); the
    # score scale is folded into the query projection so the kernels never
    # multiply a full (q_tile, Sk) tile by a scalar.
    pos_q = pos_encoding[0, :q_len, :].astype(jnp.bfloat16)
    pos_k = pos_encoding[0, :k_len, :].astype(jnp.bfloat16)
    wq_io = (wq * scale).T.astype(jnp.bfloat16)          # (in, out) layout, scaled
    bq_s = (bq * scale).astype(jnp.float32)
    wk_io = wk.T.astype(jnp.bfloat16)
    bk_s = bk.astype(jnp.float32)

    # Stage 1: full-width projections (one GEMM each, not per-head slivers).
    q = _linear_project_pallas(pos_q, wq_io, bq_s)       # (Sq, D) bf16, pre-scaled
    k = _linear_project_pallas(pos_k, wk_io, bk_s)       # (Sk, D) bf16

    # Head-major layout (h, S, d_k): keeps d_k as the full trailing block dim
    # for the score kernel ((8,128) rule); this relayout is tiny next to the
    # (h, Sq, Sk) output traffic.
    qh = q.reshape(q_len, h, d_k).transpose(1, 0, 2)
    kh = k.reshape(k_len, h, d_k).transpose(1, 0, 2)

    # Stage 2: per-head score matmul.
    scores = _scores_pallas(qh, kh)                      # (h, Sq, Sk) f32

    # scores.repeat(nbatches, 1, 1, 1) in PyTorch: keep it a lazy broadcast so
    # the B-fold copy is only materialized if a downstream consumer forces it.
    return jnp.broadcast_to(scores[None], (nbatches, h, q_len, k_len))


# ----------------------------------------------------------------------------
# Pure-JAX reference + demo
# ----------------------------------------------------------------------------
def _reference(query, key, pos_encoding, wq, bq, wk, bk, num_heads):
    """Pure-JAX f32 reference mirroring the PyTorch module (default path)."""
    nbatches, q_len = query.shape[0], query.shape[1]
    k_len = key.shape[1]
    D = pos_encoding.shape[-1]
    d_k = D // num_heads
    pq = pos_encoding[0, :q_len, :] @ wq.T + bq                 # (Sq, D)
    pk = pos_encoding[0, :k_len, :] @ wk.T + bk                 # (Sk, D)
    pq = pq.reshape(q_len, num_heads, d_k).transpose(1, 0, 2)   # (h, Sq, d_k)
    pk = pk.reshape(k_len, num_heads, d_k).transpose(1, 0, 2)   # (h, Sk, d_k)
    scores = jnp.einsum('hqd,hkd->hqk', pq, pk) / math.sqrt(2 * d_k)
    return jnp.broadcast_to(scores[None], (nbatches,) + scores.shape)


if __name__ == "__main__":
    B, S, D, H = 2, 8, 32, 4           # batch, seq, d_model, heads
    MAX_LEN = 64                        # demo-sized positional table (ref uses 1000)

    key0 = jax.random.PRNGKey(0)
    kq, kk, kv, kp, kwq, kbq, kwk, kbk = jax.random.split(key0, 8)

    query = jax.random.normal(kq, (B, S, D), dtype=jnp.float32)
    key_t = jax.random.normal(kk, (B, S, D), dtype=jnp.float32)
    value = jax.random.normal(kv, (B, S, D), dtype=jnp.float32)

    # Learned parameters: positional encoding + linears[0]/linears[1].
    pos_encoding = jax.random.normal(kp, (1, MAX_LEN, D), dtype=jnp.float32) * 0.1
    wq = jax.random.normal(kwq, (D, D), dtype=jnp.float32) * (1.0 / math.sqrt(D))
    bq = jax.random.normal(kbq, (D,), dtype=jnp.float32) * 0.02
    wk = jax.random.normal(kwk, (D, D), dtype=jnp.float32) * (1.0 / math.sqrt(D))
    bk = jax.random.normal(kbk, (D,), dtype=jnp.float32) * 0.02

    fwd = jax.jit(functools.partial(multi_headed_attention_rel, num_heads=H))
    out = jax.block_until_ready(fwd(query, key_t, value, pos_encoding,
                                    wq, bq, wk, bk))

    ref = _reference(query, key_t, pos_encoding, wq, bq, wk, bk, H)

    assert out.shape == (B, H, S, S)
    # bf16 MXU operands (f32 accumulation) -> slightly looser tolerance than pure f32.
    assert jnp.allclose(out, ref, atol=2e-3, rtol=2e-2), (
        "max abs diff %e" % float(jnp.max(jnp.abs(out - ref))))

    print("KERNEL_OK")
</pallas_src>

<mosaic_0001>
module attributes {stable_mosaic.version = 11 : i64} {
  func.func @_linear_kernel(%arg0: i32, %arg1: memref<8x32xbf16, #tpu.memory_space<vmem>>, %arg2: memref<32x32xbf16, #tpu.memory_space<vmem>>, %arg3: memref<1x32xf32, #tpu.memory_space<vmem>>, %arg4: memref<8x32xbf16, #tpu.memory_space<vmem>>) attributes {dimension_semantics = [#tpu.dimension_semantics<parallel>], iteration_bounds = array<i64: 1>, scalar_prefetch = 0 : i64, scratch_operands = 0 : i64, tpu.core_type = #tpu.core_type<tc>, window_params = [{transform_indices = @transform_0, window_bounds = array<i64: 8, 32>}, {pipeline_mode = #tpu.pipeline_mode<synchronous>, transform_indices = @transform_1, window_bounds = array<i64: 32, 32>}, {pipeline_mode = #tpu.pipeline_mode<synchronous>, transform_indices = @transform_2, window_bounds = array<i64: 1, 32>}, {transform_indices = @transform_3, window_bounds = array<i64: 8, 32>}]} {
    %c0 = arith.constant 0 : index
    %c0_0 = arith.constant 0 : index
    %0 = vector.load %arg1[%c0, %c0_0] : memref<8x32xbf16, #tpu.memory_space<vmem>>, vector<8x32xbf16>
    %c0_1 = arith.constant 0 : index
    %c0_2 = arith.constant 0 : index
    %1 = vector.load %arg2[%c0_1, %c0_2] : memref<32x32xbf16, #tpu.memory_space<vmem>>, vector<32x32xbf16>
    %cst = arith.constant dense<0.000000e+00> : vector<8x32xf32>
    %2 = tpu.matmul %0, %1, %cst {dimension_numbers = #tpu.dot_dimension_numbers<[1], [0], [0], [1], [0, 0, 1, 1], [], []>} : vector<8x32xbf16>, vector<32x32xbf16>, vector<8x32xf32> -> vector<8x32xf32>
    %c0_3 = arith.constant 0 : index
    %c0_4 = arith.constant 0 : index
    %3 = vector.load %arg3[%c0_3, %c0_4] : memref<1x32xf32, #tpu.memory_space<vmem>>, vector<1x32xf32>
    %4 = vector.broadcast %3 : vector<1x32xf32> to vector<8x32xf32>
    %5 = arith.addf %2, %4 : vector<8x32xf32>
    %6 = arith.truncf %5 : vector<8x32xf32> to vector<8x32xbf16>
    %c0_5 = arith.constant 0 : index
    %c0_6 = arith.constant 0 : index
    %7 = vector.load %arg4[%c0_5, %c0_6] : memref<8x32xbf16, #tpu.memory_space<vmem>>, vector<8x32xbf16>
    tpu.vector_store %arg4[%c0_5, %c0_6], %6 {strides = array<i32>} : memref<8x32xbf16, #tpu.memory_space<vmem>>, vector<8x32xbf16>,
    return
  }
  func.func @transform_0(%arg0: i32) -> (i32, i32) {
    %c0_i32 = arith.constant 0 : i32
    %c0_i32_0 = arith.constant 0 : i32
    return %arg0, %c0_i32 : i32, i32
  }
  func.func @transform_1(%arg0: i32) -> (i32, i32) {
    %c0_i32 = arith.constant 0 : i32
    %c0_i32_0 = arith.constant 0 : i32
    %c0_i32_1 = arith.constant 0 : i32
    return %c0_i32, %c0_i32_0 : i32, i32
  }
  func.func @transform_2(%arg0: i32) -> (i32, i32) {
    %c0_i32 = arith.constant 0 : i32
    %c0_i32_0 = arith.constant 0 : i32
    %c0_i32_1 = arith.constant 0 : i32
    return %c0_i32, %c0_i32_0 : i32, i32
  }
  func.func @transform_3(%arg0: i32) -> (i32, i32) {
    %c0_i32 = arith.constant 0 : i32
    %c0_i32_0 = arith.constant 0 : i32
    return %arg0, %c0_i32 : i32, i32
  }
}

module attributes {stable_mosaic.version = 11 : i64} {
  func.func @_scores_kernel(%arg0: i32, %arg1: i32, %arg2: memref<1x8x8xbf16, #tpu.memory_space<vmem>>, %arg3: memref<1x8x8xbf16, #tpu.memory_space<vmem>>, %arg4: memref<1x8x8xf32, #tpu.memory_space<vmem>>) attributes {dimension_semantics = [#tpu.dimension_semantics<parallel>, #tpu.dimension_semantics<parallel>], iteration_bounds = array<i64: 4, 1>, scalar_prefetch = 0 : i64, scratch_operands = 0 : i64, tpu.core_type = #tpu.core_type<tc>, window_params = [{transform_indices = @transform_0, window_bounds = array<i64: 1, 8, 8>}, {transform_indices = @transform_1, window_bounds = array<i64: 1, 8, 8>}, {transform_indices = @transform_2, window_bounds = array<i64: 1, 8, 8>}]} {
    %c0 = arith.constant 0 : index
    %c0_0 = arith.constant 0 : index
    %c0_1 = arith.constant 0 : index
    %0 = vector.load %arg2[%c0, %c0_0, %c0_1] : memref<1x8x8xbf16, #tpu.memory_space<vmem>>, vector<1x8x8xbf16>
    %1 = vector.shape_cast %0 : vector<1x8x8xbf16> to vector<8x8xbf16>
    %c0_2 = arith.constant 0 : index
    %c0_3 = arith.constant 0 : index
    %c0_4 = arith.constant 0 : index
    %2 = vector.load %arg3[%c0_2, %c0_3, %c0_4] : memref<1x8x8xbf16, #tpu.memory_space<vmem>>, vector<1x8x8xbf16>
    %3 = vector.shape_cast %2 : vector<1x8x8xbf16> to vector<8x8xbf16>
    %cst = arith.constant dense<0.000000e+00> : vector<8x8xf32>
    %4 = tpu.matmul %1, %3, %cst {dimension_numbers = #tpu.dot_dimension_numbers<[1], [1], [0], [0], [0, 0, 1, 0], [], []>} : vector<8x8xbf16>, vector<8x8xbf16>, vector<8x8xf32> -> vector<8x8xf32>
    %c0_5 = arith.constant 0 : index
    %c0_6 = arith.constant 0 : index
    %c0_7 = arith.constant 0 : index
    %5 = vector.load %arg4[%c0_5, %c0_6, %c0_7] : memref<1x8x8xf32, #tpu.memory_space<vmem>>, vector<1x8x8xf32>
    %6 = vector.shape_cast %5 : vector<1x8x8xf32> to vector<8x8xf32>
    %7 = vector.shape_cast %4 : vector<8x8xf32> to vector<1x8x8xf32>
    tpu.vector_store %arg4[%c0_5, %c0_6, %c0_7], %7 {strides = array<i32>} : memref<1x8x8xf32, #tpu.memory_space<vmem>>, vector<1x8x8xf32>,
    return
  }
  func.func @transform_0(%arg0: i32, %arg1: i32) -> (i32, i32, i32) {
    %c0_i32 = arith.constant 0 : i32
    %c0_i32_0 = arith.constant 0 : i32
    return %arg0, %arg1, %c0_i32 : i32, i32, i32
  }
  func.func @transform_1(%arg0: i32, %arg1: i32) -> (i32, i32, i32) {
    %c0_i32 = arith.constant 0 : i32
    %c0_i32_0 = arith.constant 0 : i32
    %c0_i32_1 = arith.constant 0 : i32
    return %arg0, %c0_i32, %c0_i32_0 : i32, i32, i32
  }
  func.func @transform_2(%arg0: i32, %arg1: i32) -> (i32, i32, i32) {
    %c0_i32 = arith.constant 0 : i32
    %c0_i32_0 = arith.constant 0 : i32
    return %arg0, %arg1, %c0_i32 : i32, i32, i32
  }
}

</mosaic_0001>

<llo_original>
// kernel: multi_headed_attention_rel.4
$region0: #{multi_headed_attention_rel.4}
  #allocation0 [shape = 'u32[]', space=smem, size = 0x4, offset = 0x4, fixed_abs, tag = 'smem constant byte address 0x4 - core index']
  #allocation1 [shape = 'u32[144,128]{1,0:T(1,128)}', space=vmem, size = 0x12000, scoped, tag = 'internal scratch']
  %s0 = inlined_call_operand.vmem [shape: bf16[8,32], index: 0, kind: input, shape index: {}]
  %s1 = inlined_call_operand.vmem [shape: bf16[32,32], index: 1, kind: input, shape index: {}]
  %s2 = inlined_call_operand.vmem [shape: f32[1,32], index: 2, kind: input, shape index: {}]
  %s3 = inlined_call_operand.vmem [shape: bf16[8,32], index: 3, kind: output, shape index: {}]
  %s4 = sld [smem:[#allocation0]]
  $region22: #{multi_headed_attention_rel.4} parent=0
    _
  %s6 = ssub.s32 1, %s4
  %s7 = scalar_select 0, %s6, %s4
  // Predicated region
  $region2: #{multi_headed_attention_rel.4} parent=0 // pred_check
    _
  $region3: #{multi_headed_attention_rel.4} parent=0 // pred_check_branch
    %9 = sbr.rel (0) target = $region5
  $region4: #{multi_headed_attention_rel.4} parent=0 // pred_region
    _
  $region5: #{multi_headed_attention_rel.4} parent=0 // pred_fallthru
    _
  // Predicated region
  $region6: #{multi_headed_attention_rel.4} parent=0 // pred_check
    _
  $region7: #{multi_headed_attention_rel.4} parent=0 // pred_check_branch
    %11 = sbr.rel (0) target = $region9
  $region8: #{multi_headed_attention_rel.4} parent=0 // pred_region
    _
  $region9: #{multi_headed_attention_rel.4} parent=0 // pred_fallthru
    _
  // Predicated region
  $region10: #{multi_headed_attention_rel.4} parent=0 // pred_check
    _
  $region11: #{multi_headed_attention_rel.4} parent=0 // pred_check_branch
    %13 = sbr.rel (0) target = $region13
  $region12: #{multi_headed_attention_rel.4} parent=0 // pred_region
    _
  $region13: #{multi_headed_attention_rel.4} parent=0 // pred_fallthru
    _
  %v15 = vld [vmem:[%s0] sm:$0xf]
  %v16 = vld [vmem:[%s1] sm:$0xf]
  %v17 = vld [vmem:[%s1 + $0x4] sm:$0xf]
  %v18 = vld [vmem:[%s1 + $0x8] sm:$0xf]
  %v19 = vld [vmem:[%s1 + $0xc] sm:$0xf]
  %v20 = vld [vmem:[%s2] sm:$0x1]
  %v22 = vlaneseq
  %v23 = vshrl.u32 %v22, 7
  %v24 = vsub.s32 0, %v23
  %v25 = vrot.slane %v20, %v24
  %v31 = vunpack.c.l.b16 %v16
  %v32 = vunpack.c.l.b16 %v17
  %v33 = vunpack.c.l.b16 %v18
  %v34 = vunpack.c.l.b16 %v19
  %v35 = vpack.c.b16 %v32, %v31
  %v36 = vpack.c.b16 %v34, %v33
  %vm39 = vcmask 261120
  %v41 = vsel %vm39, %v15, 0
  %43 = vmatprep.subr.bf16.mxu0 0
  %44 = vmatpush1.bf16.msra.mxu0 0
  %45 = vmatprep.subr.bf16.mxu0 0
  %46 = vmatpush1.bf16.msra.mxu0 0
  %47 = vmatprep.subr.bf16.mxu0 0
  %48 = vmatpush1.bf16.msra.mxu0 0
  %49 = vmatprep.subr.bf16.mxu0 0
  %50 = vmatpush1.bf16.msra.mxu0 0
  %51 = vmatprep.subr.bf16.mxu0 0
  %52 = vmatpush1.bf16.msra.mxu0 0
  %53 = vmatprep.subr.bf16.mxu0 0
  %54 = vmatpush1.bf16.msra.mxu0 0
  %55 = vmatprep.subr.bf16.mxu0 0
  %56 = vmatpush1.bf16.msra.mxu0 %v36
  %57 = vmatprep.subr.bf16.mxu0 0
  %58 = vmatpush1.bf16.msra.mxu0 %v35
  %59 = vmatprep.subr.bf16.mxu0 0
  %60 = vmatpush2.bf16.msra.mxu0 0
  %61 = vmatprep.subr.bf16.mxu0 0
  %62 = vmatpush2.bf16.msra.mxu0 0
  %63 = vmatprep.subr.bf16.mxu0 0
  %64 = vmatpush2.bf16.msra.mxu0 0
  %65 = vmatprep.subr.bf16.mxu0 0
  %66 = vmatpush2.bf16.msra.mxu0 0
  %67 = vmatprep.subr.bf16.mxu0 0
  %68 = vmatpush2.bf16.msra.mxu0 0
  %69 = vmatprep.subr.bf16.mxu0 0
  %70 = vmatpush2.bf16.msra.mxu0 0
  %71 = vmatprep.subr.bf16.mxu0 0
  %72 = vmatpush2.bf16.msra.mxu0 0
  %73 = vmatprep.subr.bf16.mxu0 0
  %74 = vmatpush2.bf16.msra.mxu0 0
  %75 = vmatprep.mubr.bf16.mxu0 0
  %76 = vmatmul.mubr.bf16.gmra.mxu0 %v41
  %v77 = vpop.f32.mrf.mxu0
  %v78 = vadd.f32 %v25, %v77
  %v79 = vpop.f32.mrf.mxu0
  %v80 = vpop.f32.mrf.mxu0
  %v81 = vpop.f32.mrf.mxu0
  %82 = vdwg.mxu0
  %v83 = vpack.c.bf16 %v78, %v78
  %vm84 = vcmask 257024
  %85 = vst.msk [vmem:[%s3] sm:$0xf] %vm84, %v83
  // Predicated region
  $region14: #{multi_headed_attention_rel.4} parent=0 // pred_check
    _
  $region15: #{multi_headed_attention_rel.4} parent=0 // pred_check_branch
    %87 = sbr.rel (0) target = $region17
  $region16: #{multi_headed_attention_rel.4} parent=0 // pred_region
    _
  $region17: #{multi_headed_attention_rel.4} parent=0 // pred_fallthru
    _
  // Predicated region
  $region18: #{multi_headed_attention_rel.4} parent=0 // pred_check
    _
  $region19: #{multi_headed_attention_rel.4} parent=0 // pred_check_branch
    %89 = sbr.rel (0) target = $region21
  $region20: #{multi_headed_attention_rel.4} parent=0 // pred_region
    _
  $region21: #{multi_headed_attention_rel.4} parent=0 // pred_fallthru
    _

// kernel: multi_headed_attention_rel.5
$region0: #{multi_headed_attention_rel.5}
  #allocation0 [shape = 'u32[]', space=smem, size = 0x4, offset = 0x4, fixed_abs, tag = 'smem constant byte address 0x4 - core index']
  #allocation1 [shape = 'u32[144,128]{1,0:T(1,128)}', space=vmem, size = 0x12000, scoped, tag = 'internal scratch']
  %s0 = inlined_call_operand.vmem [shape: bf16[4,8,8], index: 0, kind: input, shape index: {}]
  %s1 = inlined_call_operand.vmem [shape: bf16[4,8,8], index: 1, kind: input, shape index: {}]
  %s2 = inlined_call_operand.vmem [shape: f32[4,8,8], index: 2, kind: output, shape index: {}]
  %s3 = sld [smem:[#allocation0]]
  $region41: #{multi_headed_attention_rel.5} parent=0
    _
  %s5 = ssub.s32 1, %s3
  %s6 = scalar_select 0, %s5, %s3
  loop: start=0, step=1, limit=6
  $region2: #{multi_headed_attention_rel.5} parent=0 // loop_pre_header
    _
  $region3: #{multi_headed_attention_rel.5} parent=0 // loop_header
    %s8 = sphi 0, %s12
    %p9 = scmp.ge.s32.totalorder %s8, 6
    %s15 = sphi 0, %s27
    %s16 = sphi 0, %s23
    %s17 = sphi 0, %s15
    %s18 = sphi 0, %s16
    %s19 = sphi 0, %s17
    %s20 = sphi 0, %s18
    %s32 = sphi 0, %s34
    %s35 = sphi 0, %s32
    %s36 = sphi 0, %s35
    %s52 = sphi 0, %s36
    %s58 = sphi 0, %s60
    %s61 = sphi 0, %s58
    %s62 = sphi 0, %s61
    %s78 = sphi 0, %s62
    %s86 = sphi 0, %s88
    %s89 = sphi 0, %s86
    %s90 = sphi 0, %s89
    %s106 = sphi 0, %s90
  $region4: #{multi_headed_attention_rel.5} parent=0 // loop_header_branch
    %11 = sbr.rel (%p9) target = $region8
  $region5: #{multi_headed_attention_rel.5} parent=0 // loop_body
    %s13 = ssub.s32 %s8, 1
    %s14 = ssub.s32 %s8, 2
    %s21 = sadd.s32 1, %s16
    %p22 = scmp.ge.s32.totalorder %s21, 1
    %s23 = scalar_select %p22, 0, %s21
    %s24 = sadd.s32 1, %s15
    %s25 = scalar_select %p22, %s24, %s15
    %p26 = scmp.ge.s32.totalorder %s25, 4
    %s27 = scalar_select %p26, 0, %s25
    %s28 = ssub.s32 %s15, %s27
    %s29 = ssub.s32 %s16, %s23
    %s30 = sor.u32 %s28, %s29
    %p31 = scmp.eq.s32.totalorder %s30, 0
    %s33 = sadd.s32 %s32, 1
    %s34 = scalar_select %p31, %s32, %s33
    %p37 = pneg %p31
    %p38 = scmp.eq.s32.totalorder %s8, 3
    %p39 = por %p37, %p38
    %p40 = scmp.ne.s32.totalorder %s32, %s35
    %p41 = scmp.eq.s32.totalorder %s8, 0
    %p42 = por %p40, %p41
    %p43 = scmp.ne.s32.totalorder %s32, %s35
    %p44 = scmp.eq.s32.totalorder %s13, 3
    %p45 = por %p43, %p44
    %p46 = scmp.ne.s32.totalorder %s35, %s36
    %p47 = scmp.eq.s32.totalorder %s13, 0
    %p48 = por %p46, %p47
    %p49 = scmp.ne.s32.totalorder %s35, %s36
    %p50 = scmp.eq.s32.totalorder %s14, 3
    %p51 = por %p49, %p50
    %p53 = scmp.ne.s32.totalorder %s36, %s52
    %p54 = scmp.eq.s32.totalorder %s14, 0
    %p55 = por %p53, %p54
    %s56 = ssub.s32 %s15, %s27
    %p57 = scmp.eq.s32.totalorder %s56, 0
    %s59 = sadd.s32 %s58, 1
    %s60 = scalar_select %p57, %s58, %s59
    %p63 = pneg %p57
    %p64 = scmp.eq.s32.totalorder %s8, 3
    %p65 = por %p63, %p64
    %p66 = scmp.ne.s32.totalorder %s58, %s61
    %p67 = scmp.eq.s32.totalorder %s8, 0
    %p68 = por %p66, %p67
    %p69 = scmp.ne.s32.totalorder %s58, %s61
    %p70 = scmp.eq.s32.totalorder %s13, 3
    %p71 = por %p69, %p70
    %p72 = scmp.ne.s32.totalorder %s61, %s62
    %p73 = scmp.eq.s32.totalorder %s13, 0
    %p74 = por %p72, %p73
    %p75 = scmp.ne.s32.totalorder %s61, %s62
    %p76 = scmp.eq.s32.totalorder %s14, 3
    %p77 = por %p75, %p76
    %p79 = scmp.ne.s32.totalorder %s62, %s78
    %p80 = scmp.eq.s32.totalorder %s14, 0
    %p81 = por %p79, %p80
    %s82 = ssub.s32 %s15, %s27
    %s83 = ssub.s32 %s16, %s23
    %s84 = sor.u32 %s82, %s83
    %p85 = scmp.eq.s32.totalorder %s84, 0
    %s87 = sadd.s32 %s86, 1
    %s88 = scalar_select %p85, %s86, %s87
    %p91 = pneg %p85
    %p92 = scmp.eq.s32.totalorder %s8, 3
    %p93 = por %p91, %p92
    %p94 = scmp.ne.s32.totalorder %s86, %s89
    %p95 = scmp.eq.s32.totalorder %s8, 0
    %p96 = por %p94, %p95
    %p97 = scmp.ne.s32.totalorder %s86, %s89
    %p98 = scmp.eq.s32.totalorder %s13, 3
    %p99 = por %p97, %p98
    %p100 = scmp.ne.s32.totalorder %s89, %s90
    %p101 = scmp.eq.s32.totalorder %s13, 0
    %p102 = por %p100, %p101
    %p103 = scmp.ne.s32.totalorder %s89, %s90
    %p104 = scmp.eq.s32.totalorder %s14, 3
    %p105 = por %p103, %p104
    %p107 = scmp.ne.s32.totalorder %s90, %s106
    %p108 = scmp.eq.s32.totalorder %s14, 0
    %p109 = por %p107, %p108
    %p110 = scmp.le.s32.totalorder 1, %s8
    %p111 = scmp.lt.s32.totalorder %s8, 5
    %p112 = pnand %p110, %p111
    %p113 = pneg %p112
    // Predicated region
    $region9: #{multi_headed_attention_rel.5} parent=5 // pred_check
      _
    $region10: #{multi_headed_attention_rel.5} parent=5 // pred_check_branch
      %115 = sbr.rel (%p112) target = $region12
    $region11: #{multi_headed_attention_rel.5} parent=5 // pred_region
      %s116 = ssub.s32 %s8, 1
    $region12: #{multi_headed_attention_rel.5} parent=5 // pred_fallthru
      _
    %p117 = scmp.lt.s32.totalorder %s8, 4
    // Predicated region
    $region13: #{multi_headed_attention_rel.5} parent=5 // pred_check
      %p118 = pneg %p117
    $region14: #{multi_headed_attention_rel.5} parent=5 // pred_check_branch
      %120 = sbr.rel (%p118) target = $region16
    $region15: #{multi_headed_attention_rel.5} parent=5 // pred_region
      // Predicated region
      $region17: #{multi_headed_attention_rel.5} parent=15 // pred_check
        %p121 = pneg %p42
      $region18: #{multi_headed_attention_rel.5} parent=15 // pred_check_branch
        %123 = sbr.rel (%p121) target = $region20
      $region19: #{multi_headed_attention_rel.5} parent=15 // pred_region
        %p124 = scmp.lt.s32.totalorder %s15, 3
        %s125 = scalar_select %p124, %s15, 3
        %p126 = scmp.lt.s32.totalorder %s16, 0
        %s127 = scalar_select %p126, %s16, 0
        %s128 = sadd.s32 %s127, %s125
        %s129 = smul.addr %s128, 4
        %s130 = scalar_lea.vmem %s0, %s129
      $region20: #{multi_headed_attention_rel.5} parent=15 // pred_fallthru
        _
      // Predicated region
      $region21: #{multi_headed_attention_rel.5} parent=15 // pred_check
        %p131 = pneg %p68
      $region22: #{multi_headed_attention_rel.5} parent=15 // pred_check_branch
        %133 = sbr.rel (%p131) target = $region24
      $region23: #{multi_headed_attention_rel.5} parent=15 // pred_region
        %p134 = scmp.lt.s32.totalorder %s15, 3
        %s135 = scalar_select %p134, %s15, 3
        %s136 = smul.addr %s135, 4
        %s137 = scalar_lea.vmem %s1, %s136
      $region24: #{multi_headed_attention_rel.5} parent=15 // pred_fallthru
        _
    $region16: #{multi_headed_attention_rel.5} parent=5 // pred_fallthru
      _
    %p138 = scmp.le.s32.totalorder 1, %s8
    %p139 = scmp.lt.s32.totalorder %s8, 5
    %p140 = pnand %p138, %p139
    %p141 = pneg %p140
    // Predicated region
    $region25: #{multi_headed_attention_rel.5} parent=5 // pred_check
      _
    $region26: #{multi_headed_attention_rel.5} parent=5 // pred_check_branch
      %143 = sbr.rel (%p140) target = $region28
    $region27: #{multi_headed_attention_rel.5} parent=5 // pred_region
      %s144 = ssub.s32 %s8, 1
      %p145 = scmp.lt.s32.totalorder %s17, 3
      %s146 = scalar_select %p145, %s17, 3
      %p147 = scmp.lt.s32.totalorder %s18, 0
      %s148 = scalar_select %p147, %s18, 0
      %s149 = sadd.s32 %s148, %s146
      %s150 = smul.addr %s149, 4
      %s151 = scalar_lea.vmem %s0, %s150
      %p152 = pneg %p48
      %p153 = pneg %p45
      %p154 = scmp.lt.s32.totalorder %s17, 3
      %s155 = scalar_select %p154, %s17, 3
      %s156 = smul.addr %s155, 4
      %s157 = scalar_lea.vmem %s1, %s156
      %p158 = pneg %p74
      %p159 = pneg %p71
      %p160 = pneg %p102
      %p161 = pneg %p99
      %p162 = scmp.lt.s32.totalorder %s17, 3
      %s163 = scalar_select %p162, %s17, 3
      %p164 = scmp.lt.s32.totalorder %s18, 0
      %s165 = scalar_select %p164, %s18, 0
      %s166 = sadd.s32 %s165, %s163
      %s167 = smul.addr %s166, 8
      %s168 = scalar_lea.vmem %s2, %s167
      %p169 = scmp.lt.s32.totalorder %s17, 3
      %s170 = scalar_select %p169, %s17, 3
      %p171 = scmp.lt.s32.totalorder %s18, 0
      %s172 = scalar_select %p171, %s18, 0
      %s173 = sadd.s32 %s172, %s170
      %s174 = smul.addr %s173, 4
      %s175 = scalar_lea.vmem %s0, %s174
      %p176 = scmp.lt.s32.totalorder %s17, 3
      %s177 = scalar_select %p176, %s17, 3
      %s178 = smul.addr %s177, 4
      %s179 = scalar_lea.vmem %s1, %s178
      %p180 = scmp.lt.s32.totalorder %s17, 3
      %s181 = scalar_select %p180, %s17, 3
      %p182 = scmp.lt.s32.totalorder %s18, 0
      %s183 = scalar_select %p182, %s18, 0
      %s184 = sadd.s32 %s183, %s181
      %s185 = smul.addr %s184, 8
      %s186 = scalar_lea.vmem %s2, %s185
      %v188 = vld [vmem:[%s175] sm:$0xf]
      %v189 = vld [vmem:[%s179] sm:$0xf]
      %vm190 = vcmask 64512
      %v192 = vsel %vm190, %v188, 0
      %v195 = vsel %vm190, %v189, 0
      %197 = vmatprep.subr.bf16.mxu0 0
      %198 = vmatpush1.bf16.xpose.msra.mxu0 0
      %199 = vmatprep.subr.bf16.mxu0 0
      %200 = vmatpush1.bf16.xpose.msra.mxu0 0
      %201 = vmatprep.subr.bf16.mxu0 0
      %202 = vmatpush1.bf16.xpose.msra.mxu0 0
      %203 = vmatprep.subr.bf16.mxu0 0
      %204 = vmatpush1.bf16.xpose.msra.mxu0 0
      %205 = vmatprep.subr.bf16.mxu0 0
      %206 = vmatpush1.bf16.xpose.msra.mxu0 0
      %207 = vmatprep.subr.bf16.mxu0 0
      %208 = vmatpush1.bf16.xpose.msra.mxu0 0
      %209 = vmatprep.subr.bf16.mxu0 0
      %210 = vmatpush1.bf16.xpose.msra.mxu0 0
      %211 = vmatprep.subr.bf16.mxu0 0
      %212 = vmatpush1.bf16.xpose.msra.mxu0 %v195
      %213 = vmatprep.subr.bf16.mxu0 0
      %214 = vmatpush2.bf16.xpose.msra.mxu0 0
      %215 = vmatprep.subr.bf16.mxu0 0
      %216 = vmatpush2.bf16.xpose.msra.mxu0 0
      %217 = vmatprep.subr.bf16.mxu0 0
      %218 = vmatpush2.bf16.xpose.msra.mxu0 0
      %219 = vmatprep.subr.bf16.mxu0 0
      %220 = vmatpush2.bf16.xpose.msra.mxu0 0
      %221 = vmatprep.subr.bf16.mxu0 0
      %222 = vmatpush2.bf16.xpose.msra.mxu0 0
      %223 = vmatprep.subr.bf16.mxu0 0
      %224 = vmatpush2.bf16.xpose.msra.mxu0 0
      %225 = vmatprep.subr.bf16.mxu0 0
      %226 = vmatpush2.bf16.xpose.msra.mxu0 0
      %227 = vmatprep.subr.bf16.mxu0 0
      %228 = vmatpush2.bf16.xpose.msra.mxu0 0
      %229 = vmatprep.mubr.bf16.mxu0 0
      %230 = vmatmul.mubr.bf16.gmra.mxu0 %v192
      %v231 = vpop.f32.mrf.mxu0
      %v232 = vadd.f32 0.0, %v231
      %v233 = vpop.f32.mrf.mxu0
      %v234 = vpop.f32.mrf.mxu0
      %v235 = vpop.f32.mrf.mxu0
      %236 = vdwg.mxu0
      %237 = vst.msk [vmem:[%s186] sm:$0xff] %vm190, %v232
      %p238 = scmp.lt.s32.totalorder %s17, 3
      %s239 = scalar_select %p238, %s17, 3
      %p240 = scmp.lt.s32.totalorder %s18, 0
      %s241 = scalar_select %p240, %s18, 0
      %s242 = sadd.s32 %s241, %s239
      %s243 = smul.addr %s242, 8
      %s244 = scalar_lea.vmem %s2, %s243
      // Predicated region
      $region29: #{multi_headed_attention_rel.5} parent=27 // pred_check
        %p245 = pneg %p99
      $region30: #{multi_headed_attention_rel.5} parent=27 // pred_check_branch
        %247 = sbr.rel (%p245) target = $region32
      $region31: #{multi_headed_attention_rel.5} parent=27 // pred_region
        _
      $region32: #{multi_headed_attention_rel.5} parent=27 // pred_fallthru
        _
    $region28: #{multi_headed_attention_rel.5} parent=5 // pred_fallthru
      _
    %p248 = scmp.le.s32.totalorder 2, %s8
    // Predicated region
    $region33: #{multi_headed_attention_rel.5} parent=5 // pred_check
      %p249 = pneg %p248
    $region34: #{multi_headed_attention_rel.5} parent=5 // pred_check_branch
      %251 = sbr.rel (%p249) target = $region36
    $region35: #{multi_headed_attention_rel.5} parent=5 // pred_region
      %s252 = ssub.s32 %s8, 2
      // Predicated region
      $region37: #{multi_headed_attention_rel.5} parent=35 // pred_check
        %p253 = pneg %p105
      $region38: #{multi_headed_attention_rel.5} parent=35 // pred_check_branch
        %255 = sbr.rel (%p253) target = $region40
      $region39: #{multi_headed_attention_rel.5} parent=35 // pred_region
        %p256 = scmp.lt.s32.totalorder %s19, 3
        %s257 = scalar_select %p256, %s19, 3
        %p258 = scmp.lt.s32.totalorder %s20, 0
        %s259 = scalar_select %p258, %s20, 0
        %s260 = sadd.s32 %s259, %s257
        %s261 = smul.addr %s260, 8
        %s262 = scalar_lea.vmem %s2, %s261
      $region40: #{multi_headed_attention_rel.5} parent=35 // pred_fallthru
        _
    $region36: #{multi_headed_attention_rel.5} parent=5 // pred_fallthru
      _
  $region6: #{multi_headed_attention_rel.5} parent=0 // loop_footer
    %s12 = sadd.s32 1, %s8
  $region7: #{multi_headed_attention_rel.5} parent=0 // loop_footer_branch
    %7 = sbr.rel target = $region3
  $region8: #{multi_headed_attention_rel.5} parent=0 // loop_exit
    _

</llo_original>
